<compile_context>
chip_gen: v5e
topology: v5e:2x2
jax: 0.10.0
libtpu: 0.0.40
codegen_flags: <defaults>
</compile_context>

<pallas_src>
import numpy as np
import jax
import jax.numpy as jnp
from jax.experimental import pallas as pl
from jax.experimental.pallas import tpu as pltpu

_LANE = 128
_SUBLANE = 8
_MIB = 1024 * 1024
_VMEM_RESERVE = 8 * _MIB          # headroom for compiler-internal scratch / semaphores


def _round_up(x, m):
    return ((x + m - 1) // m) * m


def _vmem_capacity_bytes():
    """Physical VMEM per core (v5e/v6e: 128 MiB, v7x: 64 MiB)."""
    try:
        return int(pltpu.get_tpu_info().vmem_capacity_bytes)
    except Exception:
        return 64 * _MIB          # conservative fallback (v7x-sized)


def _const_spec(block_shape, index_map):
    """BlockSpec for an operand whose block never changes: single-buffer it."""
    try:
        return pl.BlockSpec(block_shape, index_map, pipeline_mode=pl.Buffered(1))
    except (TypeError, ValueError):
        # Older jax without pipeline_mode: fall back to default double buffering.
        return pl.BlockSpec(block_shape, index_map)


# ---------------------------------------------------------------------------
# Kernels
# ---------------------------------------------------------------------------
def mlp_kernel(x_ref, w1_ref, b1_ref, w2_ref, b2_ref, o_ref):
    """One row tile of  relu(x @ W1 + b1) @ W2 + b2  with resident weights."""
    x = x_ref[...].astype(w1_ref.dtype)                    # f32 -> bf16 in-kernel
    h = jnp.dot(x, w1_ref[...], preferred_element_type=jnp.float32)   # MXU, f32 acc
    h = jnp.maximum(h + b1_ref[...], 0.0)                  # bias + ReLU in f32 (VPU)
    h = h.astype(w2_ref.dtype)                             # bf16 for second MXU pass
    o = jnp.dot(h, w2_ref[...], preferred_element_type=jnp.float32)
    o_ref[...] = (o + b2_ref[...]).astype(o_ref.dtype)     # lane-dense store


def mlp_kernel_ksplit(x_ref, w1_ref, b1_ref, w2_ref, b2_ref, o_ref, acc_ref):
    """K-split variant: first matmul accumulated over a feature-axis grid."""
    k = pl.program_id(1)

    @pl.when(k == 0)
    def _():
        acc_ref[...] = jnp.zeros_like(acc_ref)

    x = x_ref[...].astype(w1_ref.dtype)
    acc_ref[...] += jnp.dot(x, w1_ref[...], preferred_element_type=jnp.float32)

    @pl.when(k == pl.num_programs(1) - 1)
    def _():
        h = jnp.maximum(acc_ref[...] + b1_ref[...], 0.0).astype(w2_ref.dtype)
        o = jnp.dot(h, w2_ref[...], preferred_element_type=jnp.float32)
        o_ref[...] = (o + b2_ref[...]).astype(o_ref.dtype)


# ---------------------------------------------------------------------------
# Parameter layout (one-time, outside the hot path)
# ---------------------------------------------------------------------------
def prepare_params(w1, b1, w2, b2, *, compute_dtype=jnp.bfloat16,
                   lane=_LANE, force_ksplit=False, tile_k=512):
    """Transpose weights to (in, out), zero-pad hidden/class axes to lane
    multiples, cast to the MXU compute dtype.  Chooses the resident-weight
    fast path or the K-split path based on the VMEM budget."""
    nhid, nfeat = w1.shape
    nclass = w2.shape[0]
    nhid_p = _round_up(nhid, lane)
    nclass_p = _round_up(nclass, lane)

    w_bpe = np.dtype(compute_dtype).itemsize
    budget = _vmem_capacity_bytes() - _VMEM_RESERVE
    resident_bytes = (nfeat * nhid_p + nhid_p * nclass_p) * w_bpe
    ksplit = bool(force_ksplit) or resident_bytes > budget // 3

    if ksplit:
        tile_k = max(lane, min(int(tile_k), _round_up(nfeat, lane)))
        tile_k = _round_up(tile_k, lane)
        nfeat_p = _round_up(nfeat, tile_k)
    else:
        tile_k = None
        nfeat_p = nfeat       # full-extent feature block: no padding, no extra x copy

    w1_t = jnp.zeros((nfeat_p, nhid_p), compute_dtype)
    w1_t = w1_t.at[:nfeat, :nhid].set(w1.T.astype(compute_dtype))
    w2_t = jnp.zeros((nhid_p, nclass_p), compute_dtype)
    w2_t = w2_t.at[:nhid, :nclass].set(w2.T.astype(compute_dtype))
    b1_r = jnp.zeros((1, nhid_p), jnp.float32).at[0, :nhid].set(b1.astype(jnp.float32))
    b2_r = jnp.zeros((1, nclass_p), jnp.float32).at[0, :nclass].set(b2.astype(jnp.float32))

    dims = dict(nfeat=nfeat, nhid=nhid, nclass=nclass,
                nfeat_p=nfeat_p, nhid_p=nhid_p, nclass_p=nclass_p,
                ksplit=ksplit, tile_k=tile_k)
    return (w1_t, b1_r, w2_t, b2_r), dims


def _default_tile_m(N, cap=512):
    """Row tile: multiple of 8, up to `cap`, preferring a divisor of the
    8-padded row count so no row-padding copy is needed for large N."""
    n8 = _round_up(N, _SUBLANE)
    if n8 <= cap:
        return n8
    for t in range(cap, cap // 2 - 1, -_SUBLANE):
        if n8 % t == 0:
            return t
    return cap


# ---------------------------------------------------------------------------
# Forward
# ---------------------------------------------------------------------------
def mlp_forward(x, params, dims, *, tile_m=None, out_dtype=None):
    """x: (N, nfeat) float32.  params/dims from prepare_params.
    Returns (N, nclass) in out_dtype (default: x.dtype)."""
    w1_t, b1_r, w2_t, b2_r = params
    N, nfeat = x.shape
    assert nfeat == dims["nfeat"], "feature dim mismatch vs prepare_params"
    nfeat_p, nhid_p, nclass_p = dims["nfeat_p"], dims["nhid_p"], dims["nclass_p"]
    ksplit, tile_k = dims["ksplit"], dims["tile_k"]
    out_dtype = x.dtype if out_dtype is None else out_dtype

    x_bpe = np.dtype(x.dtype).itemsize
    w_bpe = np.dtype(w1_t.dtype).itemsize
    capacity = _vmem_capacity_bytes()
    budget = capacity - _VMEM_RESERVE

    if tile_m is None:
        tile_m = _default_tile_m(N)
    tile_m = max(_SUBLANE, _round_up(min(int(tile_m), _round_up(N, _SUBLANE)), _SUBLANE))

    def footprint(tm):
        if ksplit:
            return (2 * tile_k * nhid_p * w_bpe           # W1 K-blocks, double-buffered
                    + nhid_p * nclass_p * w_bpe           # W2 resident, single-buffered
                    + (nhid_p + nclass_p) * 4             # biases
                    + 2 * tm * tile_k * x_bpe             # x tile, double-buffered
                    + 2 * tm * nclass_p * 4               # out tile, double-buffered
                    + 3 * tm * nhid_p * 4)                # f32 accumulator + intermediates
        return ((nfeat_p * nhid_p + nhid_p * nclass_p) * w_bpe   # weights, single-buffered
                + (nhid_p + nclass_p) * 4                        # biases
                + 2 * tm * nfeat_p * x_bpe                       # x tile, double-buffered
                + 2 * tm * nclass_p * 4                          # out tile, double-buffered
                + 2 * tm * nhid_p * 4)                           # h intermediates

    # Shrink the row tile if the per-tile footprint would blow the VMEM budget.
    while tile_m > _SUBLANE and footprint(tile_m) > budget:
        tile_m = max(_SUBLANE, _round_up(tile_m // 2, _SUBLANE))

    n_pad = _round_up(N, tile_m)
    feat_in = nfeat_p if ksplit else nfeat

    if n_pad != N or feat_in != nfeat:
        x_in = jnp.zeros((n_pad, feat_in), x.dtype).at[:N, :nfeat].set(x)
    else:
        x_in = x            # no extra HBM pass when shapes already line up

    vmem_limit = int(min(max(int(footprint(tile_m) * 1.3) + 2 * _MIB, 32 * _MIB),
                         budget))

    if ksplit:
        grid = (n_pad // tile_m, nfeat_p // tile_k)
        kernel = mlp_kernel_ksplit
        in_specs = [
            pl.BlockSpec((tile_m, tile_k), lambda i, k: (i, k)),     # x row/K tile
            pl.BlockSpec((tile_k, nhid_p), lambda i, k: (k, 0)),     # W1 K block
            _const_spec((1, nhid_p), lambda i, k: (0, 0)),           # b1
            _const_spec((nhid_p, nclass_p), lambda i, k: (0, 0)),    # W2 resident
            _const_spec((1, nclass_p), lambda i, k: (0, 0)),         # b2
        ]
        out_specs = pl.BlockSpec((tile_m, nclass_p), lambda i, k: (i, 0))
        scratch_shapes = [pltpu.VMEM((tile_m, nhid_p), jnp.float32)]
        dim_sem = ("parallel", "arbitrary")
    else:
        grid = (n_pad // tile_m,)
        kernel = mlp_kernel
        in_specs = [
            pl.BlockSpec((tile_m, nfeat), lambda i: (i, 0)),         # x row tile (f32)
            _const_spec((nfeat, nhid_p), lambda i: (0, 0)),          # W1 resident
            _const_spec((1, nhid_p), lambda i: (0, 0)),              # b1
            _const_spec((nhid_p, nclass_p), lambda i: (0, 0)),       # W2 resident
            _const_spec((1, nclass_p), lambda i: (0, 0)),            # b2
        ]
        out_specs = pl.BlockSpec((tile_m, nclass_p), lambda i: (i, 0))  # lane-dense
        scratch_shapes = []
        dim_sem = ("parallel",)

    out_p = pl.pallas_call(
        kernel,
        out_shape=jax.ShapeDtypeStruct((n_pad, nclass_p), jnp.float32),
        grid_spec=pltpu.PrefetchScalarGridSpec(
            num_scalar_prefetch=0,
            grid=grid,
            in_specs=in_specs,
            out_specs=out_specs,
            scratch_shapes=scratch_shapes),
        compiler_params=pltpu.CompilerParams(
            dimension_semantics=dim_sem,
            vmem_limit_bytes=vmem_limit),
    )(x_in, w1_t, b1_r, w2_t, b2_r)

    # Strip padding back to the logical output.
    return out_p[:N, :dims["nclass"]].astype(out_dtype)


# ---------------------------------------------------------------------------
# Init / reference / test
# ---------------------------------------------------------------------------
def init_linear(key, out_features, in_features, dtype=jnp.float32):
    """Deterministic init matching nn.Linear.reset_parameters (U(+-1/sqrt(fan_in)))."""
    kw, kb = jax.random.split(key)
    bound = 1.0 / float(np.sqrt(in_features))
    w = jax.random.uniform(kw, (out_features, in_features), dtype, -bound, bound)
    b = jax.random.uniform(kb, (out_features,), dtype, -bound, bound)
    return w, b


def _reference_mixed(x, w1, b1, w2, b2):
    """Mixed-precision reference matching the kernel's bf16 / f32-acc path."""
    xb, w1b, w2b = (t.astype(jnp.bfloat16) for t in (x, w1, w2))
    h = jnp.maximum(jnp.dot(xb, w1b.T, preferred_element_type=jnp.float32) + b1, 0.0)
    return jnp.dot(h.astype(jnp.bfloat16), w2b.T,
                   preferred_element_type=jnp.float32) + b2


if __name__ == "__main__":
    key = jax.random.PRNGKey(0)

    # ---- Case 1: resident-weight fast path (small MLP, eval mode) ----------
    N, nfeat, nhid, nclass = 20, 32, 64, 8
    kx, k1, k2, key = jax.random.split(key, 4)
    x = jax.random.normal(kx, (N, nfeat), jnp.float32)
    w1, b1 = init_linear(k1, nhid, nfeat)      # layer1: (nhid, nfeat)
    w2, b2 = init_linear(k2, nclass, nhid)     # layer2: (nclass, nhid)

    params, dims = prepare_params(w1, b1, w2, b2)
    fwd = jax.jit(lambda xx: mlp_forward(xx, params, dims))
    out = jax.block_until_ready(fwd(x))
    assert out.shape == (N, nclass)

    ref = _reference_mixed(x, w1, b1, w2, b2)
    assert jnp.allclose(out, ref, atol=2e-3, rtol=2e-3), \
        "fast path: mismatch vs mixed-precision reference"
    ref32 = jnp.maximum(x @ w1.T + b1, 0.0) @ w2.T + b2
    assert jnp.allclose(out, ref32, atol=5e-2, rtol=5e-2), \
        "fast path: mismatch vs f32 reference"

    # ---- Case 2: K-split path (forced, exercises the f32 accumulator) ------
    N2, nfeat2, nhid2, nclass2 = 24, 320, 96, 10
    kx, k1, k2, key = jax.random.split(key, 4)
    x2 = jax.random.normal(kx, (N2, nfeat2), jnp.float32)
    w1k, b1k = init_linear(k1, nhid2, nfeat2)
    w2k, b2k = init_linear(k2, nclass2, nhid2)

    params2, dims2 = prepare_params(w1k, b1k, w2k, b2k,
                                    force_ksplit=True, tile_k=128)
    fwd2 = jax.jit(lambda xx: mlp_forward(xx, params2, dims2))
    out2 = jax.block_until_ready(fwd2(x2))
    assert out2.shape == (N2, nclass2)

    ref2 = _reference_mixed(x2, w1k, b1k, w2k, b2k)
    assert jnp.allclose(out2, ref2, atol=5e-3, rtol=5e-3), \
        "ksplit: mismatch vs mixed-precision reference"
    ref2_32 = jnp.maximum(x2 @ w1k.T + b1k, 0.0) @ w2k.T + b2k
    assert jnp.allclose(out2, ref2_32, atol=5e-2, rtol=5e-2), \
        "ksplit: mismatch vs f32 reference"

    print("KERNEL_OK")
</pallas_src>

<mosaic_0001>
module attributes {stable_mosaic.version = 11 : i64} {
  func.func @mlp_kernel(%arg0: i32, %arg1: memref<24x32xf32, #tpu.memory_space<vmem>>, %arg2: memref<32x128xbf16, #tpu.memory_space<vmem>>, %arg3: memref<1x128xf32, #tpu.memory_space<vmem>>, %arg4: memref<128x128xbf16, #tpu.memory_space<vmem>>, %arg5: memref<1x128xf32, #tpu.memory_space<vmem>>, %arg6: memref<24x128xf32, #tpu.memory_space<vmem>>) attributes {dimension_semantics = [#tpu.dimension_semantics<parallel>], iteration_bounds = array<i64: 1>, scalar_prefetch = 0 : i64, scratch_operands = 0 : i64, tpu.core_type = #tpu.core_type<tc>, window_params = [{transform_indices = @transform_0, window_bounds = array<i64: 24, 32>}, {pipeline_mode = #tpu.pipeline_mode<synchronous>, transform_indices = @transform_1, window_bounds = array<i64: 32, 128>}, {pipeline_mode = #tpu.pipeline_mode<synchronous>, transform_indices = @transform_2, window_bounds = array<i64: 1, 128>}, {pipeline_mode = #tpu.pipeline_mode<synchronous>, transform_indices = @transform_3, window_bounds = array<i64: 128, 128>}, {pipeline_mode = #tpu.pipeline_mode<synchronous>, transform_indices = @transform_4, window_bounds = array<i64: 1, 128>}, {transform_indices = @transform_5, window_bounds = array<i64: 24, 128>}]} {
    %c0 = arith.constant 0 : index
    %c0_0 = arith.constant 0 : index
    %0 = vector.load %arg1[%c0, %c0_0] : memref<24x32xf32, #tpu.memory_space<vmem>>, vector<24x32xf32>
    %1 = arith.truncf %0 : vector<24x32xf32> to vector<24x32xbf16>
    %c0_1 = arith.constant 0 : index
    %c0_2 = arith.constant 0 : index
    %2 = vector.load %arg2[%c0_1, %c0_2] : memref<32x128xbf16, #tpu.memory_space<vmem>>, vector<32x128xbf16>
    %cst = arith.constant dense<0.000000e+00> : vector<24x128xf32>
    %3 = tpu.matmul %1, %2, %cst {dimension_numbers = #tpu.dot_dimension_numbers<[1], [0], [0], [1], [0, 0, 1, 1], [], []>} : vector<24x32xbf16>, vector<32x128xbf16>, vector<24x128xf32> -> vector<24x128xf32>
    %c0_3 = arith.constant 0 : index
    %c0_4 = arith.constant 0 : index
    %4 = vector.load %arg3[%c0_3, %c0_4] : memref<1x128xf32, #tpu.memory_space<vmem>>, vector<1x128xf32>
    %5 = vector.broadcast %4 : vector<1x128xf32> to vector<24x128xf32>
    %6 = arith.addf %3, %5 : vector<24x128xf32>
    %cst_5 = arith.constant 0.000000e+00 : f32
    %7 = vector.broadcast %cst_5 : f32 to vector<24x128xf32>
    %8 = arith.maximumf %6, %7 : vector<24x128xf32>
    %9 = arith.truncf %8 : vector<24x128xf32> to vector<24x128xbf16>
    %c0_6 = arith.constant 0 : index
    %c0_7 = arith.constant 0 : index
    %10 = vector.load %arg4[%c0_6, %c0_7] : memref<128x128xbf16, #tpu.memory_space<vmem>>, vector<128x128xbf16>
    %cst_8 = arith.constant dense<0.000000e+00> : vector<24x128xf32>
    %11 = tpu.matmul %9, %10, %cst_8 {dimension_numbers = #tpu.dot_dimension_numbers<[1], [0], [0], [1], [0, 0, 1, 1], [], []>} : vector<24x128xbf16>, vector<128x128xbf16>, vector<24x128xf32> -> vector<24x128xf32>
    %c0_9 = arith.constant 0 : index
    %c0_10 = arith.constant 0 : index
    %12 = vector.load %arg5[%c0_9, %c0_10] : memref<1x128xf32, #tpu.memory_space<vmem>>, vector<1x128xf32>
    %13 = vector.broadcast %12 : vector<1x128xf32> to vector<24x128xf32>
    %14 = arith.addf %11, %13 : vector<24x128xf32>
    %c0_11 = arith.constant 0 : index
    %c0_12 = arith.constant 0 : index
    %15 = vector.load %arg6[%c0_11, %c0_12] : memref<24x128xf32, #tpu.memory_space<vmem>>, vector<24x128xf32>
    tpu.vector_store %arg6[%c0_11, %c0_12], %14 {strides = array<i32>} : memref<24x128xf32, #tpu.memory_space<vmem>>, vector<24x128xf32>,
    return
  }
  func.func @transform_0(%arg0: i32) -> (i32, i32) {
    %c0_i32 = arith.constant 0 : i32
    %c0_i32_0 = arith.constant 0 : i32
    return %arg0, %c0_i32 : i32, i32
  }
  func.func @transform_1(%arg0: i32) -> (i32, i32) {
    %c0_i32 = arith.constant 0 : i32
    %c0_i32_0 = arith.constant 0 : i32
    %c0_i32_1 = arith.constant 0 : i32
    return %c0_i32, %c0_i32_0 : i32, i32
  }
  func.func @transform_2(%arg0: i32) -> (i32, i32) {
    %c0_i32 = arith.constant 0 : i32
    %c0_i32_0 = arith.constant 0 : i32
    %c0_i32_1 = arith.constant 0 : i32
    return %c0_i32, %c0_i32_0 : i32, i32
  }
  func.func @transform_3(%arg0: i32) -> (i32, i32) {
    %c0_i32 = arith.constant 0 : i32
    %c0_i32_0 = arith.constant 0 : i32
    %c0_i32_1 = arith.constant 0 : i32
    return %c0_i32, %c0_i32_0 : i32, i32
  }
  func.func @transform_4(%arg0: i32) -> (i32, i32) {
    %c0_i32 = arith.constant 0 : i32
    %c0_i32_0 = arith.constant 0 : i32
    %c0_i32_1 = arith.constant 0 : i32
    return %c0_i32, %c0_i32_0 : i32, i32
  }
  func.func @transform_5(%arg0: i32) -> (i32, i32) {
    %c0_i32 = arith.constant 0 : i32
    %c0_i32_0 = arith.constant 0 : i32
    return %arg0, %c0_i32 : i32, i32
  }
}

</mosaic_0001>

<llo_original>
// kernel: _lambda_.1
$region0: #{_lambda_.1}
  #allocation0 [shape = 'u32[]', space=smem, size = 0x4, offset = 0x4, fixed_abs, tag = 'smem constant byte address 0x4 - core index']
  #allocation1 [shape = 'u32[72,128]{1,0:T(1,128)}', space=vmem, size = 0x9000, scoped, tag = 'internal scratch']
  %s0 = inlined_call_operand.vmem [shape: f32[24,32], index: 0, kind: input, shape index: {}]
  %s1 = inlined_call_operand.vmem [shape: bf16[32,128], index: 1, kind: input, shape index: {}]
  %s2 = inlined_call_operand.vmem [shape: f32[1,128], index: 2, kind: input, shape index: {}]
  %s3 = inlined_call_operand.hbm [shape: bf16[128,128], index: 3, kind: input, shape index: {}]
  %s4 = inlined_call_operand.vmem [shape: f32[1,128], index: 4, kind: input, shape index: {}]
  %s5 = inlined_call_operand.vmem [shape: f32[24,128], index: 5, kind: output, shape index: {}]
  %s6 = sld [smem:[#allocation0]]
  $region34: #{_lambda_.1} parent=0
    _
  %s8 = ssub.s32 1, %s6
  %s9 = scalar_select 0, %s8, %s6
  $region1: #{_lambda_.1} parent=0
    #allocation2 [shape = 'u8[32768]{0}', space=vmem, size = 0x8000, scoped, tag = 'input window, operand 3, single buffered']
    #allocation3 [shape = 's32[1]{0}', space=sflag, size = 0x4, scoped, tag = 'scoped memory for _lambda_.1']
    %10 = vsyncpa [#allocation3], 0
    // Predicated region
    $region2: #{_lambda_.1} parent=1 // pred_check
      _
    $region3: #{_lambda_.1} parent=1 // pred_check_branch
      %12 = sbr.rel (0) target = $region5
    $region4: #{_lambda_.1} parent=1 // pred_region
      _
    $region5: #{_lambda_.1} parent=1 // pred_fallthru
      _
    // Predicated region
    $region6: #{_lambda_.1} parent=1 // pred_check
      _
    $region7: #{_lambda_.1} parent=1 // pred_check_branch
      %14 = sbr.rel (0) target = $region9
    $region8: #{_lambda_.1} parent=1 // pred_region
      _
    $region9: #{_lambda_.1} parent=1 // pred_fallthru
      _
    // Predicated region
    $region10: #{_lambda_.1} parent=1 // pred_check
      _
    $region11: #{_lambda_.1} parent=1 // pred_check_branch
      %16 = sbr.rel (0) target = $region13
    $region12: #{_lambda_.1} parent=1 // pred_region
      _
    $region13: #{_lambda_.1} parent=1 // pred_fallthru
      _
    // Predicated region
    $region14: #{_lambda_.1} parent=1 // pred_check
      _
    $region15: #{_lambda_.1} parent=1 // pred_check_branch
      %18 = sbr.rel (0) target = $region17
    $region16: #{_lambda_.1} parent=1 // pred_region
      %20 = vsyncadd [#allocation3], 0
      %s21 = sshll.u32 %s3, 4
      %s22 = int_to_ptr.hbm [resolvable:$true] %s21
      %s23 = sshll.u32 [#allocation2], 4
      %s24 = int_to_ptr.vmem [resolvable:$true] %s23
      %29 = dma.hbm_to_vmem [thread:$0]  %s22, 1024, %s24, [#allocation3], 64, 64, 4
    $region17: #{_lambda_.1} parent=1 // pred_fallthru
      _
    // Predicated region
    $region18: #{_lambda_.1} parent=1 // pred_check
      _
    $region19: #{_lambda_.1} parent=1 // pred_check_branch
      %31 = sbr.rel (0) target = $region21
    $region20: #{_lambda_.1} parent=1 // pred_region
      _
    $region21: #{_lambda_.1} parent=1 // pred_fallthru
      _
    // Predicated region
    $region22: #{_lambda_.1} parent=1 // pred_check
      _
    $region23: #{_lambda_.1} parent=1 // pred_check_branch
      %33 = sbr.rel (0) target = $region25
    $region24: #{_lambda_.1} parent=1 // pred_region
      %35 = dma.done [#allocation3], 1024
    $region25: #{_lambda_.1} parent=1 // pred_fallthru
      _
    %v37 = vld [vmem:[%s0] sm:$0xff]
    %v38 = vld [vmem:[%s0 + $0x8] sm:$0xff]
    %v39 = vld [vmem:[%s0 + $0x10] sm:$0xff]
    %v40 = vpack.c.bf16 %v38, %v37
    %v41 = vpack.c.bf16 %v39, %v39
    %v42 = vld [vmem:[%s1] sm:$0xf]
    %v43 = vld [vmem:[%s1 + $0x4] sm:$0xf]
    %v44 = vld [vmem:[%s1 + $0x8] sm:$0xf]
    %v45 = vld [vmem:[%s1 + $0xc] sm:$0xf]
    %v46 = vld [vmem:[%s2] sm:$0x1]
    %v48 = vperm.slane %v46, 0
    %v54 = vunpack.c.l.b16 %v42
    %v55 = vunpack.c.l.b16 %v43
    %v56 = vunpack.c.l.b16 %v44
    %v57 = vunpack.c.l.b16 %v45
    %v58 = vpack.c.b16 %v55, %v54
    %v59 = vpack.c.b16 %v57, %v56
    %vm62 = vcmask 261120
    %v64 = vsel %vm62, %v40, 0
    %v67 = vsel %vm62, %v41, 0
    %69 = vmatpush.bf16.msra.mxu0 0
    %70 = vmatpush.bf16.msra.mxu0 0
    %71 = vmatpush.bf16.msra.mxu0 0
    %72 = vmatpush.bf16.msra.mxu0 0
    %73 = vmatpush.bf16.msra.mxu0 0
    %74 = vmatpush.bf16.msra.mxu0 0
    %75 = vmatpush.bf16.msra.mxu0 %v59
    %76 = vmatpush.bf16.msra.mxu0 %v58
    %77 = vmatmul.bf16.gmra.mxu0 %v64
    %v78 = vpop.f32.mrf.mxu0
    %v79 = vadd.f32 %v48, %v78
    %v80 = vpop.f32.mrf.mxu0
    %v81 = vadd.f32 %v48, %v80
    %82 = vmatmul.bf16.gmra.mxu0 %v67
    %v83 = vpop.f32.mrf.mxu0
    %v84 = vadd.f32 %v48, %v83
    %v85 = vpop.f32.mrf.mxu0
    %86 = vdwg.mxu0
    %v87 = vmax.f32 %v79, 0.0
    %v88 = vmax.f32 %v81, 0.0
    %v89 = vmax.f32 %v84, 0.0
    %v90 = vpack.c.bf16 %v88, %v87
    %v91 = vpack.c.bf16 %v89, %v89
    %v92 = vld [vmem:[#allocation2] sm:$0xf]
    %v93 = vld [vmem:[#allocation2 + $0x4] sm:$0xf]
    %v94 = vld [vmem:[#allocation2 + $0x8] sm:$0xf]
    %v95 = vld [vmem:[#allocation2 + $0xc] sm:$0xf]
    %v96 = vld [vmem:[#allocation2 + $0x10] sm:$0xf]
    %v97 = vld [vmem:[#allocation2 + $0x14] sm:$0xf]
    %v98 = vld [vmem:[#allocation2 + $0x18] sm:$0xf]
    %v99 = vld [vmem:[#allocation2 + $0x1c] sm:$0xf]
    %v100 = vld [vmem:[#allocation2 + $0x20] sm:$0xf]
    %v101 = vld [vmem:[#allocation2 + $0x24] sm:$0xf]
    %v102 = vld [vmem:[#allocation2 + $0x28] sm:$0xf]
    %v103 = vld [vmem:[#allocation2 + $0x2c] sm:$0xf]
    %v104 = vld [vmem:[#allocation2 + $0x30] sm:$0xf]
    %v105 = vld [vmem:[#allocation2 + $0x34] sm:$0xf]
    %v106 = vld [vmem:[#allocation2 + $0x38] sm:$0xf]
    %v107 = vld [vmem:[#allocation2 + $0x3c] sm:$0xf]
    %v108 = vld [vmem:[%s4] sm:$0x1]
    %v110 = vperm.slane %v108, 0
    %v128 = vunpack.c.l.b16 %v92
    %v129 = vunpack.c.l.b16 %v93
    %v130 = vunpack.c.l.b16 %v94
    %v131 = vunpack.c.l.b16 %v95
    %v132 = vunpack.c.l.b16 %v96
    %v133 = vunpack.c.l.b16 %v97
    %v134 = vunpack.c.l.b16 %v98
    %v135 = vunpack.c.l.b16 %v99
    %v136 = vunpack.c.l.b16 %v100
    %v137 = vunpack.c.l.b16 %v101
    %v138 = vunpack.c.l.b16 %v102
    %v139 = vunpack.c.l.b16 %v103
    %v140 = vunpack.c.l.b16 %v104
    %v141 = vunpack.c.l.b16 %v105
    %v142 = vunpack.c.l.b16 %v106
    %v143 = vunpack.c.l.b16 %v107
    %v144 = vpack.c.b16 %v129, %v128
    %v145 = vpack.c.b16 %v131, %v130
    %v146 = vpack.c.b16 %v133, %v132
    %v147 = vpack.c.b16 %v135, %v134
    %v148 = vpack.c.b16 %v137, %v136
    %v149 = vpack.c.b16 %v139, %v138
    %v150 = vpack.c.b16 %v141, %v140
    %v151 = vpack.c.b16 %v143, %v142
    %160 = vmatpush.bf16.msra.mxu0 %v151
    %161 = vmatpush.bf16.msra.mxu0 %v150
    %162 = vmatpush.bf16.msra.mxu0 %v149
    %163 = vmatpush.bf16.msra.mxu0 %v148
    %164 = vmatpush.bf16.msra.mxu0 %v147
    %165 = vmatpush.bf16.msra.mxu0 %v146
    %166 = vmatpush.bf16.msra.mxu0 %v145
    %167 = vmatpush.bf16.msra.mxu0 %v144
    %168 = vmatmul.bf16.gmra.mxu0 %v90
    %v169 = vpop.f32.mrf.mxu0
    %v170 = vadd.f32 %v110, %v169
    %v171 = vpop.f32.mrf.mxu0
    %v172 = vadd.f32 %v110, %v171
    %173 = vmatmul.bf16.gmra.mxu0 %v91
    %v174 = vpop.f32.mrf.mxu0
    %v175 = vadd.f32 %v110, %v174
    %v176 = vpop.f32.mrf.mxu0
    %177 = vdwg.mxu0
    %178 = vst [vmem:[%s5] sm:$0xff] %v170
    %179 = vst [vmem:[%s5 + $0x8] sm:$0xff] %v172
    %180 = vst [vmem:[%s5 + $0x10] sm:$0xff] %v175
    // Predicated region
    $region26: #{_lambda_.1} parent=1 // pred_check
      _
    $region27: #{_lambda_.1} parent=1 // pred_check_branch
      %182 = sbr.rel (0) target = $region29
    $region28: #{_lambda_.1} parent=1 // pred_region
      _
    $region29: #{_lambda_.1} parent=1 // pred_fallthru
      _
    // Predicated region
    $region30: #{_lambda_.1} parent=1 // pred_check
      _
    $region31: #{_lambda_.1} parent=1 // pred_check_branch
      %184 = sbr.rel (0) target = $region33
    $region32: #{_lambda_.1} parent=1 // pred_region
      _
    $region33: #{_lambda_.1} parent=1 // pred_fallthru
      _
    %185 = vsyncpa [#allocation3], 1

</llo_original>
